<compile_context>
chip_gen: v5e
topology: v5e:2x2
jax: 0.10.0
libtpu: 0.0.40
codegen_flags: <defaults>
</compile_context>

<pallas_src>
import functools

import numpy as np
import jax
import jax.numpy as jnp
from jax import lax
from jax.experimental import pallas as pl
from jax.experimental.pallas import tpu as pltpu


def _sgns_kernel(idx_ref, iw_ref, ow_ref, out_ref, *, B):
    """Fused skip-gram negative-sampling loss.

    idx_ref : (B + B*K, 3) int32, VMEM.  col 0 = word index, col 1 = batch id,
              col 2 = sign (+1 positive / -1 negative).
              Rows [0, B)     : input words   (cols 1,2 unused for these rows).
              Rows [B, B+B*K) : per-b [oword, nword_0 .. nword_{n-1}] targets.
    iw_ref  : (V, D2) f32 input-embedding table, whole table VMEM-resident.
    ow_ref  : (V, D2) f32 output-embedding table, whole table VMEM-resident.
    out_ref : (1, 1) f32 SMEM scalar output = -(sum of log-sigmoids) / B.

    Precondition: word indices must lie in [0, V).  Out-of-range indices give
    an all-zero one-hot (score 0 -> -log 2 contribution) instead of erroring
    like torch.nn.Embedding.
    """
    N = idx_ref.shape[0]            # B + B*K
    V = iw_ref.shape[0]

    idx = idx_ref[...]                                            # (N, 3)
    words = idx[:, 0:1]                                           # (N, 1)

    # One one-hot compare for every index (input words and all targets).
    lane_v = lax.broadcasted_iota(jnp.int32, (N, V), 1)
    onehot = (lane_v == words).astype(jnp.float32)                # (N, V)

    # Row gathers via one-hot matmuls (only the rows we need).
    iv = jnp.dot(onehot[:B, :], iw_ref[...],
                 preferred_element_type=jnp.float32)              # (B, D2)
    tv = jnp.dot(onehot[B:, :], ow_ref[...],
                 preferred_element_type=jnp.float32)              # (R, D2)

    # scores_full[r, b] = tv[r] . iv[b]; keep only the b the row belongs to.
    scores_full = lax.dot_general(tv, iv, (((1,), (1,)), ((), ())),
                                  preferred_element_type=jnp.float32)  # (R, B)
    bid = idx[B:, 1:2]                                            # (R, 1)
    col_b = lax.broadcasted_iota(jnp.int32, scores_full.shape, 1)
    scores = jnp.sum(jnp.where(col_b == bid, scores_full, 0.0),
                     axis=-1, keepdims=True)                      # (R, 1)

    # +score for the output word, -score for negatives, then a single stable
    # log-sigmoid pass: log(sigmoid(x)) = min(x, 0) - log1p(exp(-|x|)).
    signed = scores * idx[B:, 2:3].astype(jnp.float32)            # (R, 1)
    ls = jnp.minimum(signed, 0.0) - jnp.log1p(jnp.exp(-jnp.abs(signed)))

    # Fused epilogue: -(mean over batch), stored as a scalar in SMEM.
    out_ref[0, 0] = jnp.sum(ls) * (-1.0 / B)


def embedding_forward(iword, owords, nwords, iw_weight, ow_weight):
    """Pallas implementation of Embedding.forward.

    iword, owords : (B,)         int32 word indices
    nwords        : (B, n_negs)  int32 negative-sample indices (sampled by the
                    caller; torch's in-forward uniform_ RNG stream cannot be
                    reproduced)
    iw_weight, ow_weight : (vocab_size, embedding_size // 2) float32
    returns scalar loss = -mean_b( log(sig(ov.iv)) + sum_k log(sig(-nv_k.iv)) )
    """
    B = int(iword.shape[0])
    n_negs = int(nwords.shape[1])
    K = 1 + n_negs
    R = B * K

    # Pack every index the kernel needs into ONE int32 array -> one DMA.
    targets = jnp.concatenate(
        [owords.reshape(B, 1).astype(jnp.int32), nwords.astype(jnp.int32)],
        axis=1).reshape(R)                                        # per-b [ow, nws]
    words = jnp.concatenate([iword.reshape(B).astype(jnp.int32), targets])
    bid = np.concatenate([np.arange(B), np.repeat(np.arange(B), K)]).astype(np.int32)
    sign = np.concatenate([np.ones(B, np.int32),
                           np.tile(np.array([1] + [-1] * n_negs, np.int32), B)])
    packed = jnp.stack([words, jnp.asarray(bid), jnp.asarray(sign)], axis=1)

    out = pl.pallas_call(
        functools.partial(_sgns_kernel, B=B),
        out_shape=jax.ShapeDtypeStruct((1, 1), jnp.float32),
        in_specs=[pl.BlockSpec(memory_space=pltpu.MemorySpace.VMEM)] * 3,
        out_specs=pl.BlockSpec(memory_space=pltpu.MemorySpace.SMEM),
    )(packed, iw_weight.astype(jnp.float32), ow_weight.astype(jnp.float32))

    # TODO(synk): for real vocab sizes (tables no longer VMEM-resident) switch
    # to a PrefetchScalarGridSpec DMA row-gather; for large B on v7x add a grid
    # over B with dimension_semantics=("parallel",) to shard across both TCs.
    return out[0, 0]


def _reference_forward(iword, owords, nwords, iw_w, ow_w):
    iv = iw_w[iword]                                   # (B, D2)
    ov = ow_w[owords]                                  # (B, D2)
    nv = -ow_w[nwords]                                 # (B, n_negs, D2)
    oloss = jnp.log(jax.nn.sigmoid(jnp.sum(ov * iv, axis=-1)))
    nloss = jnp.sum(
        jnp.log(jax.nn.sigmoid(jnp.sum(nv * iv[:, None, :], axis=-1))), axis=1)
    return -jnp.mean(oloss + nloss)


if __name__ == "__main__":
    vocab_size = 64
    embedding_size = 64          # ivectors/ovectors have embedding_size // 2 = 32
    n_negs = 5
    B = 8

    key = jax.random.PRNGKey(0)
    k_iw, k_ow, k_i, k_o, k_n = jax.random.split(key, 5)

    # deterministic parameter init (nn.Embedding default: N(0, 1))
    iw_weight = jax.random.normal(k_iw, (vocab_size, embedding_size // 2), jnp.float32)
    ow_weight = jax.random.normal(k_ow, (vocab_size, embedding_size // 2), jnp.float32)

    # example inputs
    iword = jax.random.randint(k_i, (B,), 0, vocab_size, dtype=jnp.int32)
    owords = jax.random.randint(k_o, (B,), 0, vocab_size, dtype=jnp.int32)
    # TODO(synk): torch's in-forward uniform_ RNG stream is not reproducible;
    # negatives are sampled deterministically here with jax.random instead.
    nwords = jnp.floor(
        jax.random.uniform(k_n, (B, n_negs), minval=0.0,
                           maxval=float(vocab_size - 1))).astype(jnp.int32)

    loss = jax.jit(embedding_forward)(iword, owords, nwords, iw_weight, ow_weight)
    jax.block_until_ready(loss)

    ref = _reference_forward(iword, owords, nwords, iw_weight, ow_weight)
    assert jnp.allclose(loss, ref, rtol=1e-5, atol=1e-5), (loss, ref)

    print("KERNEL_OK")
</pallas_src>

<mosaic_0001>
module attributes {stable_mosaic.version = 11 : i64} {
  func.func @_sgns_kernel(%arg0: memref<56x3xi32, #tpu.memory_space<vmem>>, %arg1: memref<64x32xf32, #tpu.memory_space<vmem>>, %arg2: memref<64x32xf32, #tpu.memory_space<vmem>>, %arg3: memref<1x1xf32, #tpu.memory_space<smem>>) attributes {dimension_semantics = [], scalar_prefetch = 0 : i64, scratch_operands = 0 : i64, tpu.core_type = #tpu.core_type<tc>} {
    %c0 = arith.constant 0 : index
    %c0_0 = arith.constant 0 : index
    %0 = vector.load %arg0[%c0, %c0_0] : memref<56x3xi32, #tpu.memory_space<vmem>>, vector<56x3xi32>
    %1 = vector.extract_strided_slice %0 {offsets = [0, 0], sizes = [56, 1], strides = [1, 1]} : vector<56x3xi32> to vector<56x1xi32>
    %2 = tpu.iota {dimensions = array<i32: 1>} : vector<56x64xi32>
    %3 = vector.broadcast %1 : vector<56x1xi32> to vector<56x64xi32>
    %4 = arith.cmpi eq, %2, %3 : vector<56x64xi32>
    %5 = arith.extui %4 : vector<56x64xi1> to vector<56x64xi32>
    %6 = arith.sitofp %5 : vector<56x64xi32> to vector<56x64xf32>
    %7 = vector.extract_strided_slice %6 {offsets = [0, 0], sizes = [8, 64], strides = [1, 1]} : vector<56x64xf32> to vector<8x64xf32>
    %c0_1 = arith.constant 0 : index
    %c0_2 = arith.constant 0 : index
    %8 = vector.load %arg1[%c0_1, %c0_2] : memref<64x32xf32, #tpu.memory_space<vmem>>, vector<64x32xf32>
    %cst = arith.constant dense<0.000000e+00> : vector<8x32xf32>
    %9 = tpu.matmul %7, %8, %cst {dimension_numbers = #tpu.dot_dimension_numbers<[1], [0], [0], [1], [0, 0, 1, 1], [], []>} : vector<8x64xf32>, vector<64x32xf32>, vector<8x32xf32> -> vector<8x32xf32>
    %10 = vector.extract_strided_slice %6 {offsets = [8, 0], sizes = [48, 64], strides = [1, 1]} : vector<56x64xf32> to vector<48x64xf32>
    %c0_3 = arith.constant 0 : index
    %c0_4 = arith.constant 0 : index
    %11 = vector.load %arg2[%c0_3, %c0_4] : memref<64x32xf32, #tpu.memory_space<vmem>>, vector<64x32xf32>
    %cst_5 = arith.constant dense<0.000000e+00> : vector<48x32xf32>
    %12 = tpu.matmul %10, %11, %cst_5 {dimension_numbers = #tpu.dot_dimension_numbers<[1], [0], [0], [1], [0, 0, 1, 1], [], []>} : vector<48x64xf32>, vector<64x32xf32>, vector<48x32xf32> -> vector<48x32xf32>
    %cst_6 = arith.constant dense<0.000000e+00> : vector<48x8xf32>
    %13 = tpu.matmul %12, %9, %cst_6 {dimension_numbers = #tpu.dot_dimension_numbers<[1], [1], [0], [0], [0, 0, 1, 0], [], []>} : vector<48x32xf32>, vector<8x32xf32>, vector<48x8xf32> -> vector<48x8xf32>
    %14 = vector.extract_strided_slice %0 {offsets = [8, 1], sizes = [48, 1], strides = [1, 1]} : vector<56x3xi32> to vector<48x1xi32>
    %15 = tpu.iota {dimensions = array<i32: 1>} : vector<48x8xi32>
    %16 = vector.broadcast %14 : vector<48x1xi32> to vector<48x8xi32>
    %17 = arith.cmpi eq, %15, %16 : vector<48x8xi32>
    %cst_7 = arith.constant 0.000000e+00 : f32
    %18 = vector.broadcast %cst_7 : f32 to vector<48x8xf32>
    %19 = arith.select %17, %13, %18 : vector<48x8xi1>, vector<48x8xf32>
    %cst_8 = arith.constant dense<0.000000e+00> : vector<48xf32>
    %20 = vector.multi_reduction <add>, %19, %cst_8 [1] : vector<48x8xf32> to vector<48xf32>
    %21 = vector.shape_cast %20 : vector<48xf32> to vector<48x1xf32>
    %22 = vector.extract_strided_slice %0 {offsets = [8, 2], sizes = [48, 1], strides = [1, 1]} : vector<56x3xi32> to vector<48x1xi32>
    %23 = arith.sitofp %22 : vector<48x1xi32> to vector<48x1xf32>
    %24 = arith.mulf %21, %23 : vector<48x1xf32>
    %cst_9 = arith.constant 0.000000e+00 : f32
    %25 = vector.broadcast %cst_9 : f32 to vector<48x1xf32>
    %26 = arith.minimumf %24, %25 : vector<48x1xf32>
    %27 = math.absf %24 : vector<48x1xf32>
    %cst_10 = arith.constant 0.000000e+00 : f32
    %28 = vector.broadcast %cst_10 : f32 to vector<48x1xf32>
    %29 = arith.subf %28, %27 : vector<48x1xf32>
    %30 = math.exp %29 : vector<48x1xf32>
    %31 = math.log1p %30 : vector<48x1xf32>
    %32 = arith.subf %26, %31 : vector<48x1xf32>
    %33 = vector.shape_cast %32 : vector<48x1xf32> to vector<1x48x1xf32>
    %cst_11 = arith.constant dense<0.000000e+00> : vector<1xf32>
    %34 = vector.multi_reduction <add>, %33, %cst_11 [1, 2] : vector<1x48x1xf32> to vector<1xf32>
    %35 = vector.shape_cast %34 : vector<1xf32> to vector<1x1x1xf32>
    %36 = vector.extract %35[0, 0, 0] : f32 from vector<1x1x1xf32>
    %cst_12 = arith.constant -1.250000e-01 : f32
    %37 = arith.mulf %36, %cst_12 : f32
    %c0_13 = arith.constant 0 : index
    %c0_14 = arith.constant 0 : index
    %38 = memref.load %arg3[%c0_13, %c0_14] : memref<1x1xf32, #tpu.memory_space<smem>>
    memref.store %37, %arg3[%c0_13, %c0_14] : memref<1x1xf32, #tpu.memory_space<smem>>
    return
  }
}

</mosaic_0001>

<llo_original>
// kernel: embedding_forward.1
$region0: #{embedding_forward.1}
  #allocation0 [shape = 'u32[]', space=smem, size = 0x4, offset = 0x4, fixed_abs, tag = 'smem constant byte address 0x4 - core index']
  #allocation1 [shape = 'u32[72,128]{1,0:T(1,128)}', space=vmem, size = 0x9000, scoped, tag = 'internal scratch']
  %s0 = inlined_call_operand.vmem [shape: s32[56,3], index: 0, kind: input, shape index: {}]
  %s1 = inlined_call_operand.vmem [shape: f32[64,32], index: 1, kind: input, shape index: {}]
  %s2 = inlined_call_operand.vmem [shape: f32[64,32], index: 2, kind: input, shape index: {}]
  %s3 = inlined_call_operand.hbm [shape: f32[1,1], index: 3, kind: output, shape index: {}]
  %s4 = sld [smem:[#allocation0]]
  $region22: #{embedding_forward.1} parent=0
    _
  %s6 = ssub.s32 1, %s4
  %s7 = scalar_select 0, %s6, %s4
  $region1: #{embedding_forward.1} parent=0
    #allocation2 [shape = 'u8[512]{0}', space=smem, size = 0x200, scoped, tag = 'output window, operand 0, single buffered']
    #allocation3 [shape = 's32[1]{0}', space=sflag, size = 0x4, scoped, tag = 'scoped memory for embedding_forward.1']
    %8 = vsyncpa [#allocation3], 0
    // Predicated region
    $region2: #{embedding_forward.1} parent=1 // pred_check
      _
    $region3: #{embedding_forward.1} parent=1 // pred_check_branch
      %10 = sbr.rel (0) target = $region5
    $region4: #{embedding_forward.1} parent=1 // pred_region
      _
    $region5: #{embedding_forward.1} parent=1 // pred_fallthru
      _
    // Predicated region
    $region6: #{embedding_forward.1} parent=1 // pred_check
      _
    $region7: #{embedding_forward.1} parent=1 // pred_check_branch
      %12 = sbr.rel (0) target = $region9
    $region8: #{embedding_forward.1} parent=1 // pred_region
      _
    $region9: #{embedding_forward.1} parent=1 // pred_fallthru
      _
    // Predicated region
    $region10: #{embedding_forward.1} parent=1 // pred_check
      _
    $region11: #{embedding_forward.1} parent=1 // pred_check_branch
      %14 = sbr.rel (0) target = $region13
    $region12: #{embedding_forward.1} parent=1 // pred_region
      _
    $region13: #{embedding_forward.1} parent=1 // pred_fallthru
      _
    %v15 = vld [vmem:[%s0] sm:$0xff]
    %v16 = vld [vmem:[%s0 + $0x8] sm:$0xff]
    %v17 = vld [vmem:[%s0 + $0x10] sm:$0xff]
    %v18 = vld [vmem:[%s0 + $0x18] sm:$0xff]
    %v19 = vld [vmem:[%s0 + $0x20] sm:$0xff]
    %v20 = vld [vmem:[%s0 + $0x28] sm:$0xff]
    %v21 = vld [vmem:[%s0 + $0x30] sm:$0xff]
    %v22 = vlaneseq
    %v23 = vand.u32 %v22, 127
    %24 = vset.pattern.permute.xlu0 0
    %25 = vperm.xlu0 %24, %v15
    %v26 = vpop.permute.xlu0 %25
    %27 = vset.pattern.permute.xlu0 0
    %28 = vperm.xlu0 %27, %v16
    %v29 = vpop.permute.xlu0 %28
    %30 = vset.pattern.permute.xlu0 0
    %31 = vperm.xlu0 %30, %v17
    %v32 = vpop.permute.xlu0 %31
    %33 = vset.pattern.permute.xlu0 0
    %34 = vperm.xlu0 %33, %v18
    %v35 = vpop.permute.xlu0 %34
    %36 = vset.pattern.permute.xlu0 0
    %37 = vperm.xlu0 %36, %v19
    %v38 = vpop.permute.xlu0 %37
    %39 = vset.pattern.permute.xlu0 0
    %40 = vperm.xlu0 %39, %v20
    %v41 = vpop.permute.xlu0 %40
    %42 = vset.pattern.permute.xlu0 0
    %43 = vperm.xlu0 %42, %v21
    %v44 = vpop.permute.xlu0 %43
    %vm45 = vcmp.eq.s32.totalorder %v23, %v26
    %vm46 = vcmp.eq.s32.totalorder %v23, %v29
    %vm47 = vcmp.eq.s32.totalorder %v23, %v32
    %vm48 = vcmp.eq.s32.totalorder %v23, %v35
    %vm49 = vcmp.eq.s32.totalorder %v23, %v38
    %vm50 = vcmp.eq.s32.totalorder %v23, %v41
    %vm51 = vcmp.eq.s32.totalorder %v23, %v44
    %v52 = vsel %vm45, 1, 0
    %v53 = vsel %vm46, 1, 0
    %v54 = vsel %vm47, 1, 0
    %v55 = vsel %vm48, 1, 0
    %v56 = vsel %vm49, 1, 0
    %v57 = vsel %vm50, 1, 0
    %v58 = vsel %vm51, 1, 0
    %v59 = vcvt.s32.f32 %v52
    %v60 = vcvt.s32.f32 %v53
    %v61 = vcvt.s32.f32 %v54
    %v62 = vcvt.s32.f32 %v55
    %v63 = vcvt.s32.f32 %v56
    %v64 = vcvt.s32.f32 %v57
    %v65 = vcvt.s32.f32 %v58
    %v66 = vld [vmem:[%s1] sm:$0xff]
    %v67 = vld [vmem:[%s1 + $0x8] sm:$0xff]
    %v68 = vld [vmem:[%s1 + $0x10] sm:$0xff]
    %v69 = vld [vmem:[%s1 + $0x18] sm:$0xff]
    %v70 = vld [vmem:[%s1 + $0x20] sm:$0xff]
    %v71 = vld [vmem:[%s1 + $0x28] sm:$0xff]
    %v72 = vld [vmem:[%s1 + $0x30] sm:$0xff]
    %v73 = vld [vmem:[%s1 + $0x38] sm:$0xff]
    %vm74 = vcmask 523264
    %v76 = vsel %vm74, %v59, 0
    %78 = vmatpush.msra.mxu0 0.0
    %79 = vmatpush.msra.mxu0 0.0
    %80 = vmatpush.msra.mxu0 0.0
    %81 = vmatpush.msra.mxu0 0.0
    %82 = vmatpush.msra.mxu0 0.0
    %83 = vmatpush.msra.mxu0 0.0
    %84 = vmatpush.msra.mxu0 0.0
    %85 = vmatpush.msra.mxu0 0.0
    %86 = vmatpush.msra.mxu0 %v73
    %87 = vmatpush.msra.mxu0 %v72
    %88 = vmatpush.msra.mxu0 %v71
    %89 = vmatpush.msra.mxu0 %v70
    %90 = vmatpush.msra.mxu0 %v69
    %91 = vmatpush.msra.mxu0 %v68
    %92 = vmatpush.msra.mxu0 %v67
    %93 = vmatpush.msra.mxu0 %v66
    %94 = vmatmul.f32.gmra.mxu0 %v76
    %v95 = vpop.f32.mrf.mxu0
    %v96 = vadd.f32 0.0, %v95
    %97 = vdwg.mxu0
    %v98 = vld [vmem:[%s2] sm:$0xff]
    %v99 = vld [vmem:[%s2 + $0x8] sm:$0xff]
    %v100 = vld [vmem:[%s2 + $0x10] sm:$0xff]
    %v101 = vld [vmem:[%s2 + $0x18] sm:$0xff]
    %v102 = vld [vmem:[%s2 + $0x20] sm:$0xff]
    %v103 = vld [vmem:[%s2 + $0x28] sm:$0xff]
    %v104 = vld [vmem:[%s2 + $0x30] sm:$0xff]
    %v105 = vld [vmem:[%s2 + $0x38] sm:$0xff]
    %v107 = vsel %vm74, %v60, 0
    %v110 = vsel %vm74, %v61, 0
    %v113 = vsel %vm74, %v62, 0
    %v116 = vsel %vm74, %v63, 0
    %v119 = vsel %vm74, %v64, 0
    %v122 = vsel %vm74, %v65, 0
    %124 = vmatpush.msra.mxu0 0.0
    %125 = vmatpush.msra.mxu0 0.0
    %126 = vmatpush.msra.mxu0 0.0
    %127 = vmatpush.msra.mxu0 0.0
    %128 = vmatpush.msra.mxu0 0.0
    %129 = vmatpush.msra.mxu0 0.0
    %130 = vmatpush.msra.mxu0 0.0
    %131 = vmatpush.msra.mxu0 0.0
    %132 = vmatpush.msra.mxu0 %v105
    %133 = vmatpush.msra.mxu0 %v104
    %134 = vmatpush.msra.mxu0 %v103
    %135 = vmatpush.msra.mxu0 %v102
    %136 = vmatpush.msra.mxu0 %v101
    %137 = vmatpush.msra.mxu0 %v100
    %138 = vmatpush.msra.mxu0 %v99
    %139 = vmatpush.msra.mxu0 %v98
    %140 = vmatmul.f32.gmra.mxu0 %v107
    %v141 = vpop.f32.mrf.mxu0
    %v142 = vadd.f32 0.0, %v141
    %143 = vmatmul.f32.gmra.mxu0 %v110
    %v144 = vpop.f32.mrf.mxu0
    %v145 = vadd.f32 0.0, %v144
    %146 = vmatmul.f32.gmra.mxu0 %v113
    %v147 = vpop.f32.mrf.mxu0
    %v148 = vadd.f32 0.0, %v147
    %149 = vmatmul.f32.gmra.mxu0 %v116
    %v150 = vpop.f32.mrf.mxu0
    %v151 = vadd.f32 0.0, %v150
    %152 = vmatmul.f32.gmra.mxu0 %v119
    %v153 = vpop.f32.mrf.mxu0
    %v154 = vadd.f32 0.0, %v153
    %155 = vmatmul.f32.gmra.mxu0 %v122
    %v156 = vpop.f32.mrf.mxu0
    %v157 = vadd.f32 0.0, %v156
    %158 = vdwg.mxu0
    %vm159 = vcmask 261120
    %v161 = vsel %vm159, %v142, 0
    %v164 = vsel %vm159, %v145, 0
    %v167 = vsel %vm159, %v148, 0
    %v170 = vsel %vm159, %v151, 0
    %v173 = vsel %vm159, %v154, 0
    %v176 = vsel %vm159, %v157, 0
    %v179 = vsel %vm159, %v96, 0
    %181 = vmatpush.xpose.msra.mxu0 0.0
    %182 = vmatpush.xpose.msra.mxu0 0.0
    %183 = vmatpush.xpose.msra.mxu0 0.0
    %184 = vmatpush.xpose.msra.mxu0 0.0
    %185 = vmatpush.xpose.msra.mxu0 0.0
    %186 = vmatpush.xpose.msra.mxu0 0.0
    %187 = vmatpush.xpose.msra.mxu0 0.0
    %188 = vmatpush.xpose.msra.mxu0 0.0
    %189 = vmatpush.xpose.msra.mxu0 0.0
    %190 = vmatpush.xpose.msra.mxu0 0.0
    %191 = vmatpush.xpose.msra.mxu0 0.0
    %192 = vmatpush.xpose.msra.mxu0 0.0
    %193 = vmatpush.xpose.msra.mxu0 0.0
    %194 = vmatpush.xpose.msra.mxu0 0.0
    %195 = vmatpush.xpose.msra.mxu0 0.0
    %196 = vmatpush.xpose.msra.mxu0 %v179
    %197 = vmatmul.f32.gmra.mxu0 %v161
    %v198 = vpop.f32.mrf.mxu0
    %v199 = vadd.f32 0.0, %v198
    %200 = vmatmul.f32.gmra.mxu0 %v164
    %v201 = vpop.f32.mrf.mxu0
    %v202 = vadd.f32 0.0, %v201
    %203 = vmatmul.f32.gmra.mxu0 %v167
    %v204 = vpop.f32.mrf.mxu0
    %v205 = vadd.f32 0.0, %v204
    %206 = vmatmul.f32.gmra.mxu0 %v170
    %v207 = vpop.f32.mrf.mxu0
    %v208 = vadd.f32 0.0, %v207
    %209 = vmatmul.f32.gmra.mxu0 %v173
    %v210 = vpop.f32.mrf.mxu0
    %v211 = vadd.f32 0.0, %v210
    %212 = vmatmul.f32.gmra.mxu0 %v176
    %v213 = vpop.f32.mrf.mxu0
    %v214 = vadd.f32 0.0, %v213
    %215 = vdwg.mxu0
    %216 = vset.pattern.permute.xlu0 1
    %217 = vperm.xlu0 %216, %v16
    %v218 = vpop.permute.xlu0 %217
    %219 = vset.pattern.permute.xlu0 1
    %220 = vperm.xlu0 %219, %v17
    %v221 = vpop.permute.xlu0 %220
    %222 = vset.pattern.permute.xlu0 1
    %223 = vperm.xlu0 %222, %v18
    %v224 = vpop.permute.xlu0 %223
    %225 = vset.pattern.permute.xlu0 1
    %226 = vperm.xlu0 %225, %v19
    %v227 = vpop.permute.xlu0 %226
    %228 = vset.pattern.permute.xlu0 1
    %229 = vperm.xlu0 %228, %v20
    %v230 = vpop.permute.xlu0 %229
    %231 = vset.pattern.permute.xlu0 1
    %232 = vperm.xlu0 %231, %v21
    %v233 = vpop.permute.xlu0 %232
    %vm234 = vcmp.eq.s32.totalorder %v23, %v218
    %vm235 = vcmp.eq.s32.totalorder %v23, %v221
    %vm236 = vcmp.eq.s32.totalorder %v23, %v224
    %vm237 = vcmp.eq.s32.totalorder %v23, %v227
    %vm238 = vcmp.eq.s32.totalorder %v23, %v230
    %vm239 = vcmp.eq.s32.totalorder %v23, %v233
    %v240 = vsel %vm234, %v199, 0.0
    %v241 = vsel %vm235, %v202, 0.0
    %v242 = vsel %vm236, %v205, 0.0
    %v243 = vsel %vm237, %v208, 0.0
    %v244 = vsel %vm238, %v211, 0.0
    %v245 = vsel %vm239, %v214, 0.0
    %vm246 = vcmask 64512
    %v247 = vsel %vm246, %v240, 0.0
    %248 = vadd.xlane.f32.xlu0 %v247
    %v249 = vpop.xlane.xlu0 %248
    %v250 = vsel %vm246, %v241, 0.0
    %251 = vadd.xlane.f32.xlu0 %v250
    %v252 = vpop.xlane.xlu0 %251
    %v253 = vsel %vm246, %v242, 0.0
    %254 = vadd.xlane.f32.xlu0 %v253
    %v255 = vpop.xlane.xlu0 %254
    %v256 = vsel %vm246, %v243, 0.0
    %257 = vadd.xlane.f32.xlu0 %v256
    %v258 = vpop.xlane.xlu0 %257
    %v259 = vsel %vm246, %v244, 0.0
    %260 = vadd.xlane.f32.xlu0 %v259
    %v261 = vpop.xlane.xlu0 %260
    %v262 = vsel %vm246, %v245, 0.0
    %263 = vadd.xlane.f32.xlu0 %v262
    %v264 = vpop.xlane.xlu0 %263
    %v265 = vcvt.s32.f32 %v16
    %v266 = vcvt.s32.f32 %v17
    %v267 = vcvt.s32.f32 %v18
    %v268 = vcvt.s32.f32 %v19
    %v269 = vcvt.s32.f32 %v20
    %v270 = vcvt.s32.f32 %v21
    %v271 = vmul.f32 %v249, %v265
    %v272 = vmul.f32 %v252, %v266
    %v273 = vmul.f32 %v255, %v267
    %v274 = vmul.f32 %v258, %v268
    %v275 = vmul.f32 %v261, %v269
    %v276 = vmul.f32 %v264, %v270
    %v277 = vmin.f32 %v271, 0.0
    %v278 = vmin.f32 %v272, 0.0
    %v279 = vmin.f32 %v273, 0.0
    %v280 = vmin.f32 %v274, 0.0
    %v281 = vmin.f32 %v275, 0.0
    %v282 = vmin.f32 %v276, 0.0
    %v283 = vand.u32 2147483647, %v271
    %v284 = vand.u32 2147483647, %v272
    %v285 = vand.u32 2147483647, %v273
    %v286 = vand.u32 2147483647, %v274
    %v287 = vand.u32 2147483647, %v275
    %v288 = vand.u32 2147483647, %v276
    %v289 = vsub.f32 0.0, %v283
    %v290 = vsub.f32 0.0, %v284
    %v291 = vsub.f32 0.0, %v285
    %v292 = vsub.f32 0.0, %v286
    %v293 = vsub.f32 0.0, %v287
    %v294 = vsub.f32 0.0, %v288
    %v295 = vmul.f32 %v289, 1.442695
    %v296 = vpow.pop %v295
    %v297 = vmul.f32 %v290, 1.442695
    %v298 = vpow.pop %v297
    %v299 = vmul.f32 %v291, 1.442695
    %v300 = vpow.pop %v299
    %v301 = vmul.f32 %v292, 1.442695
    %v302 = vpow.pop %v301
    %v303 = vmul.f32 %v293, 1.442695
    %v304 = vpow.pop %v303
    %v305 = vmul.f32 %v294, 1.442695
    %v306 = vpow.pop %v305
    %v307 = vadd.f32 %v296, 1.0
    %v308 = vlog2.pop %v307
    %v309 = vmul.f32 %v308, 0.6931472
    %v310 = vmul.f32 -0.5, %v296
    %v311 = vadd.f32 %v310, 1.0
    %v312 = vmul.f32 %v311, %v296
    %v313 = vand.u32 2147483647, %v296
    %vm314 = vcmp.lt.f32.partialorder %v313, 0.0004427343
    %v315 = vsel %vm314, %v312, %v309
    %v316 = vadd.f32 %v298, 1.0
    %v317 = vlog2.pop %v316
    %v318 = vmul.f32 %v317, 0.6931472
    %v319 = vmul.f32 -0.5, %v298
    %v320 = vadd.f32 %v319, 1.0
    %v321 = vmul.f32 %v320, %v298
    %v322 = vand.u32 2147483647, %v298
    %vm323 = vcmp.lt.f32.partialorder %v322, 0.0004427343
    %v324 = vsel %vm323, %v321, %v318
    %v325 = vadd.f32 %v300, 1.0
    %v326 = vlog2.pop %v325
    %v327 = vmul.f32 %v326, 0.6931472
    %v328 = vmul.f32 -0.5, %v300
    %v329 = vadd.f32 %v328, 1.0
    %v330 = vmul.f32 %v329, %v300
    %v331 = vand.u32 2147483647, %v300
    %vm332 = vcmp.lt.f32.partialorder %v331, 0.0004427343
    %v333 = vsel %vm332, %v330, %v327
    %v334 = vadd.f32 %v302, 1.0
    %v335 = vlog2.pop %v334
    %v336 = vmul.f32 %v335, 0.6931472
    %v337 = vmul.f32 -0.5, %v302
    %v338 = vadd.f32 %v337, 1.0
    %v339 = vmul.f32 %v338, %v302
    %v340 = vand.u32 2147483647, %v302
    %vm341 = vcmp.lt.f32.partialorder %v340, 0.0004427343
    %v342 = vsel %vm341, %v339, %v336
    %v343 = vadd.f32 %v304, 1.0
    %v344 = vlog2.pop %v343
    %v345 = vmul.f32 %v344, 0.6931472
    %v346 = vmul.f32 -0.5, %v304
    %v347 = vadd.f32 %v346, 1.0
    %v348 = vmul.f32 %v347, %v304
    %v349 = vand.u32 2147483647, %v304
    %vm350 = vcmp.lt.f32.partialorder %v349, 0.0004427343
    %v351 = vsel %vm350, %v348, %v345
    %v352 = vadd.f32 %v306, 1.0
    %v353 = vlog2.pop %v352
    %v354 = vmul.f32 %v353, 0.6931472
    %v355 = vmul.f32 -0.5, %v306
    %v356 = vadd.f32 %v355, 1.0
    %v357 = vmul.f32 %v356, %v306
    %v358 = vand.u32 2147483647, %v306
    %vm359 = vcmp.lt.f32.partialorder %v358, 0.0004427343
    %v360 = vsel %vm359, %v357, %v354
    %v361 = vsub.f32 %v277, %v315
    %v362 = vsub.f32 %v278, %v324
    %v363 = vsub.f32 %v279, %v333
    %v364 = vsub.f32 %v280, %v342
    %v365 = vsub.f32 %v281, %v351
    %v366 = vsub.f32 %v282, %v360
    %373 = vrot.lane.b32.xlu0 %v361, 126
    %v374 = vpop.permute.xlu0 %373
    %375 = vrot.lane.b32.xlu0 %v362, 126
    %v376 = vpop.permute.xlu0 %375
    %377 = vrot.lane.b32.xlu0 %v363, 126
    %v378 = vpop.permute.xlu0 %377
    %379 = vrot.lane.b32.xlu0 %v364, 126
    %v380 = vpop.permute.xlu0 %379
    %381 = vrot.lane.b32.xlu0 %v365, 126
    %v382 = vpop.permute.xlu0 %381
    %383 = vrot.lane.b32.xlu0 %v366, 126
    %v384 = vpop.permute.xlu0 %383
    %vm391 = vcmask 7168
    %v392 = vsel %vm391, %v374, 0.0
    %v393 = vsel %vm391, %v376, 0.0
    %v394 = vadd.f32 %v392, %v393
    %v395 = vsel %vm391, %v378, 0.0
    %v396 = vadd.f32 %v394, %v395
    %v397 = vsel %vm391, %v380, 0.0
    %v398 = vadd.f32 %v396, %v397
    %v399 = vsel %vm391, %v382, 0.0
    %v400 = vadd.f32 %v398, %v399
    %v401 = vsel %vm391, %v384, 0.0
    %v402 = vadd.f32 %v400, %v401
    %403 = vadd.xlane.f32.xlu0 %v402
    %v404 = vpop.xlane.xlu0 %403
    %v405 = vrot.slane %v404, 4
    %v406 = vadd.f32 %v404, %v405
    %v407 = vrot.slane %v406, 2
    %v408 = vadd.f32 %v406, %v407
    %v409 = vrot.slane %v408, 1
    %v410 = vadd.f32 %v408, %v409
    %s411 = vtos %v410
    %s412 = smul.f32 %s411, -0.125
    %s413 = scalar_lea.smem [#allocation2], 0
    %414 = sst [smem:[%s413]] %s412
    // Predicated region
    $region14: #{embedding_forward.1} parent=1 // pred_check
      _
    $region15: #{embedding_forward.1} parent=1 // pred_check_branch
      %416 = sbr.rel (0) target = $region17
    $region16: #{embedding_forward.1} parent=1 // pred_region
      %418 = vsyncadd [#allocation3], 0
      %s420 = sshll.u32 %s3, 4
      %s421 = int_to_ptr.hbm [resolvable:$true] %s420
      %423 = dma.smem_to_hbm [#allocation2], 16, %s421, [#allocation3]
    $region17: #{embedding_forward.1} parent=1 // pred_fallthru
      _
    // Predicated region
    $region18: #{embedding_forward.1} parent=1 // pred_check
      _
    $region19: #{embedding_forward.1} parent=1 // pred_check_branch
      %425 = sbr.rel (0) target = $region21
    $region20: #{embedding_forward.1} parent=1 // pred_region
      %427 = dma.done [#allocation3], 16
    $region21: #{embedding_forward.1} parent=1 // pred_fallthru
      _
    %428 = sfence
    %429 = vsyncpa [#allocation3], 1

</llo_original>
